<compile_context>
chip_gen: v5e
topology: v5e:2x2
jax: 0.10.0
libtpu: 0.0.40
codegen_flags: <defaults>
</compile_context>

<pallas_src>
import functools

import numpy as np
import jax
import jax.numpy as jnp
from jax.experimental import pallas as pl
from jax.experimental.pallas import tpu as pltpu

BN_EPS = 1e-5
HEAD_PAD = 128   # lane-dense padding of the 9-wide head output


# ---------------------------------------------------------------------------
# Kernel 1: per-point MLP + running max pool over point tiles
# ---------------------------------------------------------------------------
def stn_point_kernel(x_ref, w1_ref, b1_ref, w2_ref, b2_ref, w3_ref, b3_ref,
                     out_ref, acc_ref, *, n_points, n_padded, tile_n):
    n_idx = pl.program_id(1)

    @pl.when(n_idx == 0)
    def _():
        acc_ref[...] = jnp.full((1, 1024), -jnp.inf, jnp.float32)

    x = x_ref[0]                                   # (TILE_N, 3) f32
    w1 = w1_ref[...]                               # (3, 64) f32, BN folded

    # Layer 1: K=3 contraction as three broadcast FMAs on the VPU (an MXU
    # pass with K=3 would be nearly empty).
    h1 = (x[:, 0:1] * w1[0:1, :]
          + x[:, 1:2] * w1[1:2, :]
          + x[:, 2:3] * w1[2:3, :])
    h1 = jnp.maximum(h1 + b1_ref[...], 0.0)        # (TILE_N, 64)

    # Layers 2/3: bf16 operands, f32 accumulation on the MXU.
    h2 = jnp.dot(h1.astype(jnp.bfloat16), w2_ref[...],
                 preferred_element_type=jnp.float32)
    h2 = jnp.maximum(h2 + b2_ref[...], 0.0)        # (TILE_N, 128)

    h3 = jnp.dot(h2.astype(jnp.bfloat16), w3_ref[...],
                 preferred_element_type=jnp.float32)
    h3 = jnp.maximum(h3 + b3_ref[...], 0.0)        # (TILE_N, 1024)

    if n_padded != n_points:
        # Mask padded rows so ReLU(shift) >= 0 cannot corrupt the max-pool.
        row = n_idx * tile_n + jax.lax.broadcasted_iota(
            jnp.int32, (tile_n, 1), 0)
        h3 = jnp.where(row < n_points, h3, -jnp.inf)

    acc_ref[...] = jnp.maximum(acc_ref[...],
                               jnp.max(h3, axis=0, keepdims=True))

    @pl.when(n_idx == pl.num_programs(1) - 1)
    def _():
        out_ref[...] = acc_ref[...].reshape(out_ref.shape)


# ---------------------------------------------------------------------------
# Kernel 2: FC head 1024 -> 512 -> 256 -> 9 (padded to 128 lanes)
# ---------------------------------------------------------------------------
def stn_head_kernel(f_ref, w4_ref, b4_ref, w5_ref, b5_ref, w6_ref, b6_ref,
                    out_ref):
    f = f_ref[...]                                  # (B, 1024) f32

    h4 = jnp.dot(f.astype(jnp.bfloat16), w4_ref[...],
                 preferred_element_type=jnp.float32)
    h4 = jnp.maximum(h4 + b4_ref[...], 0.0)         # (B, 512)

    h5 = jnp.dot(h4.astype(jnp.bfloat16), w5_ref[...],
                 preferred_element_type=jnp.float32)
    h5 = jnp.maximum(h5 + b5_ref[...], 0.0)         # (B, 256)

    out_ref[...] = (jnp.dot(h5, w6_ref[...],
                            preferred_element_type=jnp.float32)
                    + b6_ref[...])                  # (B, HEAD_PAD)


# ---------------------------------------------------------------------------
# Parameter construction (deterministic, synthetic, BN folded at prep time)
# ---------------------------------------------------------------------------
def make_params(key):
    dims = [(3, 64), (64, 128), (128, 1024), (1024, 512), (512, 256), (256, 9)]
    keys = jax.random.split(key, 6 * len(dims))
    params = {}
    for i, (cin, cout) in enumerate(dims):
        kw, kb, kg, kbe, kmu, kva = keys[6 * i: 6 * i + 6]
        w = jax.random.normal(kw, (cin, cout), jnp.float32) / np.sqrt(cin)
        b = 0.1 * jax.random.normal(kb, (cout,), jnp.float32)
        if i < 5:  # conv1..3, fc1..2 are followed by BatchNorm (inference)
            gamma = 1.0 + 0.1 * jax.random.normal(kg, (cout,), jnp.float32)
            beta = 0.1 * jax.random.normal(kbe, (cout,), jnp.float32)
            mean = 0.05 * jax.random.normal(kmu, (cout,), jnp.float32)
            var = 1.0 + 0.1 * jax.random.uniform(kva, (cout,), jnp.float32)
            scale = gamma / jnp.sqrt(var + BN_EPS)
            shift = beta + scale * (b - mean)
            w_folded = w * scale[None, :]
            # Layer 1 stays f32 (VPU FMA path); big matmul weights in bf16.
            dtype = jnp.float32 if i == 0 else jnp.bfloat16
            params[f"w{i + 1}"] = w_folded.astype(dtype)
            params[f"b{i + 1}"] = shift[None, :]
        else:      # fc3: no BN; pad output channels to a lane-dense 128
            w6 = jnp.zeros((cin, HEAD_PAD), jnp.float32).at[:, :cout].set(w)
            b6 = jnp.zeros((1, HEAD_PAD), jnp.float32).at[0, :cout].set(b)
            params["w6"] = w6
            params["b6"] = b6
    return params


# ---------------------------------------------------------------------------
# Wrapper
# ---------------------------------------------------------------------------
def _round_up(x, m):
    return (x + m - 1) // m * m


def stn3d_forward(x_ncw, params):
    """x_ncw: (B, 3, N) float32, matching the PyTorch NCW convention."""
    B, C, N = x_ncw.shape
    assert C == 3
    p = params

    # TODO(synk): consume NCW blocks directly (W^T @ x formulation) to remove
    # this one-off relayout; it is memory-bound but small vs. the MLP compute.
    x = jnp.transpose(x_ncw, (0, 2, 1))            # (B, N, 3)

    # Point tiling: biggest tile that comfortably fits VMEM on v5e/v6e/v7x
    # (TILE_N=512 -> ~2 MiB h3 temp); small N collapses to a single tile.
    tile_n = min(512, _round_up(N, 8))
    n_pad = _round_up(N, tile_n)
    if n_pad != N:
        x = jnp.pad(x, ((0, 0), (0, n_pad - N), (0, 0)))
    n_tiles = n_pad // tile_n

    const = lambda shp: pl.BlockSpec(shp, lambda b, n: tuple(0 for _ in shp))

    kernel1 = functools.partial(stn_point_kernel, n_points=N, n_padded=n_pad,
                                tile_n=tile_n)

    pooled = pl.pallas_call(
        kernel1,
        out_shape=jax.ShapeDtypeStruct((B, 1, 1024), jnp.float32),
        grid_spec=pltpu.PrefetchScalarGridSpec(
            num_scalar_prefetch=0,
            grid=(B, n_tiles),
            in_specs=[
                pl.BlockSpec((1, tile_n, 3), lambda b, n: (b, n, 0)),
                const((3, 64)), const((1, 64)),
                const((64, 128)), const((1, 128)),
                const((128, 1024)), const((1, 1024)),
            ],
            out_specs=pl.BlockSpec((1, 1, 1024), lambda b, n: (b, 0, 0)),
            scratch_shapes=[pltpu.VMEM((1, 1024), jnp.float32)],
        ),
        compiler_params=pltpu.CompilerParams(
            dimension_semantics=("parallel", "arbitrary")),
    )(x, p["w1"], p["b1"], p["w2"], p["b2"], p["w3"], p["b3"])

    feat = pooled.reshape(B, 1024)                 # (B, 1024)

    full = lambda shp: pl.BlockSpec(shp, lambda i: tuple(0 for _ in shp))
    out_pad = pl.pallas_call(
        stn_head_kernel,
        out_shape=jax.ShapeDtypeStruct((B, HEAD_PAD), jnp.float32),
        grid_spec=pltpu.PrefetchScalarGridSpec(
            num_scalar_prefetch=0,
            grid=(1,),
            in_specs=[
                full((B, 1024)),
                full((1024, 512)), full((1, 512)),
                full((512, 256)), full((1, 256)),
                full((256, HEAD_PAD)), full((1, HEAD_PAD)),
            ],
            out_specs=full((B, HEAD_PAD)),
        ),
    )(feat, p["w4"], p["b4"], p["w5"], p["b5"], p["w6"], p["b6"])

    iden = jnp.array([1, 0, 0, 0, 1, 0, 0, 0, 1], jnp.float32)[None, :]
    return (out_pad[:, :9] + iden).reshape(B, 3, 3)


# ---------------------------------------------------------------------------
# Pure-JAX reference (same math / same dtype handling) for verification
# ---------------------------------------------------------------------------
def stn3d_reference(x_ncw, p):
    B = x_ncw.shape[0]
    x = jnp.transpose(x_ncw, (0, 2, 1))            # (B, N, 3)
    h = jnp.maximum(x @ p["w1"] + p["b1"], 0.0)
    h = jnp.maximum(jnp.dot(h.astype(jnp.bfloat16), p["w2"],
                            preferred_element_type=jnp.float32) + p["b2"], 0.0)
    h = jnp.maximum(jnp.dot(h.astype(jnp.bfloat16), p["w3"],
                            preferred_element_type=jnp.float32) + p["b3"], 0.0)
    f = jnp.max(h, axis=1)                          # (B, 1024)
    f = jnp.maximum(jnp.dot(f.astype(jnp.bfloat16), p["w4"],
                            preferred_element_type=jnp.float32) + p["b4"], 0.0)
    f = jnp.maximum(jnp.dot(f.astype(jnp.bfloat16), p["w5"],
                            preferred_element_type=jnp.float32) + p["b5"], 0.0)
    out = (f @ p["w6"] + p["b6"])[:, :9]
    iden = jnp.array([1, 0, 0, 0, 1, 0, 0, 0, 1], jnp.float32)[None, :]
    return (out + iden).reshape(B, 3, 3)


if __name__ == "__main__":
    key = jax.random.PRNGKey(0)
    k_param, k_x = jax.random.split(key)

    B, N = 2, 16                                   # small batch, 16 points
    params = make_params(k_param)
    x = jax.random.normal(k_x, (B, 3, N), jnp.float32)

    out = jax.block_until_ready(stn3d_forward(x, params))

    ref = stn3d_reference(x, params)
    np.testing.assert_allclose(np.asarray(out), np.asarray(ref),
                               rtol=2e-2, atol=2e-2)
    assert out.shape == (B, 3, 3)
    print("KERNEL_OK")
</pallas_src>

<mosaic_0001>
module attributes {stable_mosaic.version = 11 : i64} {
  func.func @stn_point_kernel(%arg0: i32, %arg1: i32, %arg2: memref<1x16x3xf32, #tpu.memory_space<vmem>>, %arg3: memref<3x64xf32, #tpu.memory_space<vmem>>, %arg4: memref<1x64xf32, #tpu.memory_space<vmem>>, %arg5: memref<64x128xbf16, #tpu.memory_space<vmem>>, %arg6: memref<1x128xf32, #tpu.memory_space<vmem>>, %arg7: memref<128x1024xbf16, #tpu.memory_space<vmem>>, %arg8: memref<1x1024xf32, #tpu.memory_space<vmem>>, %arg9: memref<1x1x1024xf32, #tpu.memory_space<vmem>>, %arg10: memref<1x1024xf32, #tpu.memory_space<vmem>>) attributes {dimension_semantics = [#tpu.dimension_semantics<parallel>, #tpu.dimension_semantics<arbitrary>], iteration_bounds = array<i64: 2, 1>, scalar_prefetch = 0 : i64, scratch_operands = 1 : i64, tpu.core_type = #tpu.core_type<tc>, window_params = [{transform_indices = @transform_0, window_bounds = array<i64: 1, 16, 3>}, {pipeline_mode = #tpu.pipeline_mode<synchronous>, transform_indices = @transform_1, window_bounds = array<i64: 3, 64>}, {pipeline_mode = #tpu.pipeline_mode<synchronous>, transform_indices = @transform_2, window_bounds = array<i64: 1, 64>}, {pipeline_mode = #tpu.pipeline_mode<synchronous>, transform_indices = @transform_3, window_bounds = array<i64: 64, 128>}, {pipeline_mode = #tpu.pipeline_mode<synchronous>, transform_indices = @transform_4, window_bounds = array<i64: 1, 128>}, {pipeline_mode = #tpu.pipeline_mode<synchronous>, transform_indices = @transform_5, window_bounds = array<i64: 128, 1024>}, {pipeline_mode = #tpu.pipeline_mode<synchronous>, transform_indices = @transform_6, window_bounds = array<i64: 1, 1024>}, {transform_indices = @transform_7, window_bounds = array<i64: 1, 1, 1024>}]} {
    %c0_i32 = arith.constant 0 : i32
    %0 = arith.cmpi eq, %arg1, %c0_i32 : i32
    %1 = arith.extui %0 : i1 to i32
    %c0_i32_0 = arith.constant 0 : i32
    %2 = arith.cmpi ne, %1, %c0_i32_0 : i32
    scf.if %2 {
      %cst_26 = arith.constant 0xFF800000 : f32
      %52 = vector.broadcast %cst_26 : f32 to vector<1x1024xf32>
      %c0_27 = arith.constant 0 : index
      %c0_28 = arith.constant 0 : index
      %53 = vector.load %arg10[%c0_27, %c0_28] : memref<1x1024xf32, #tpu.memory_space<vmem>>, vector<1x1024xf32>
      tpu.vector_store %arg10[%c0_27, %c0_28], %52 {strides = array<i32>} : memref<1x1024xf32, #tpu.memory_space<vmem>>, vector<1x1024xf32>,
    } else {
    }
    %c0 = arith.constant 0 : index
    %c0_1 = arith.constant 0 : index
    %c0_2 = arith.constant 0 : index
    %3 = vector.load %arg2[%c0, %c0_1, %c0_2] : memref<1x16x3xf32, #tpu.memory_space<vmem>>, vector<1x16x3xf32>
    %4 = vector.shape_cast %3 : vector<1x16x3xf32> to vector<16x3xf32>
    %c0_3 = arith.constant 0 : index
    %c0_4 = arith.constant 0 : index
    %5 = vector.load %arg3[%c0_3, %c0_4] : memref<3x64xf32, #tpu.memory_space<vmem>>, vector<3x64xf32>
    %6 = vector.extract_strided_slice %4 {offsets = [0, 0], sizes = [16, 1], strides = [1, 1]} : vector<16x3xf32> to vector<16x1xf32>
    %7 = vector.extract_strided_slice %5 {offsets = [0, 0], sizes = [1, 64], strides = [1, 1]} : vector<3x64xf32> to vector<1x64xf32>
    %8 = vector.broadcast %6 : vector<16x1xf32> to vector<16x64xf32>
    %9 = vector.broadcast %7 : vector<1x64xf32> to vector<16x64xf32>
    %10 = arith.mulf %8, %9 : vector<16x64xf32>
    %11 = vector.extract_strided_slice %4 {offsets = [0, 1], sizes = [16, 1], strides = [1, 1]} : vector<16x3xf32> to vector<16x1xf32>
    %12 = vector.extract_strided_slice %5 {offsets = [1, 0], sizes = [1, 64], strides = [1, 1]} : vector<3x64xf32> to vector<1x64xf32>
    %13 = vector.broadcast %11 : vector<16x1xf32> to vector<16x64xf32>
    %14 = vector.broadcast %12 : vector<1x64xf32> to vector<16x64xf32>
    %15 = arith.mulf %13, %14 : vector<16x64xf32>
    %16 = arith.addf %10, %15 : vector<16x64xf32>
    %17 = vector.extract_strided_slice %4 {offsets = [0, 2], sizes = [16, 1], strides = [1, 1]} : vector<16x3xf32> to vector<16x1xf32>
    %18 = vector.extract_strided_slice %5 {offsets = [2, 0], sizes = [1, 64], strides = [1, 1]} : vector<3x64xf32> to vector<1x64xf32>
    %19 = vector.broadcast %17 : vector<16x1xf32> to vector<16x64xf32>
    %20 = vector.broadcast %18 : vector<1x64xf32> to vector<16x64xf32>
    %21 = arith.mulf %19, %20 : vector<16x64xf32>
    %22 = arith.addf %16, %21 : vector<16x64xf32>
    %c0_5 = arith.constant 0 : index
    %c0_6 = arith.constant 0 : index
    %23 = vector.load %arg4[%c0_5, %c0_6] : memref<1x64xf32, #tpu.memory_space<vmem>>, vector<1x64xf32>
    %24 = vector.broadcast %23 : vector<1x64xf32> to vector<16x64xf32>
    %25 = arith.addf %22, %24 : vector<16x64xf32>
    %cst = arith.constant 0.000000e+00 : f32
    %26 = vector.broadcast %cst : f32 to vector<16x64xf32>
    %27 = arith.maximumf %25, %26 : vector<16x64xf32>
    %28 = arith.truncf %27 : vector<16x64xf32> to vector<16x64xbf16>
    %c0_7 = arith.constant 0 : index
    %c0_8 = arith.constant 0 : index
    %29 = vector.load %arg5[%c0_7, %c0_8] : memref<64x128xbf16, #tpu.memory_space<vmem>>, vector<64x128xbf16>
    %cst_9 = arith.constant dense<0.000000e+00> : vector<16x128xf32>
    %30 = tpu.matmul %28, %29, %cst_9 {dimension_numbers = #tpu.dot_dimension_numbers<[1], [0], [0], [1], [0, 0, 1, 1], [], []>} : vector<16x64xbf16>, vector<64x128xbf16>, vector<16x128xf32> -> vector<16x128xf32>
    %c0_10 = arith.constant 0 : index
    %c0_11 = arith.constant 0 : index
    %31 = vector.load %arg6[%c0_10, %c0_11] : memref<1x128xf32, #tpu.memory_space<vmem>>, vector<1x128xf32>
    %32 = vector.broadcast %31 : vector<1x128xf32> to vector<16x128xf32>
    %33 = arith.addf %30, %32 : vector<16x128xf32>
    %cst_12 = arith.constant 0.000000e+00 : f32
    %34 = vector.broadcast %cst_12 : f32 to vector<16x128xf32>
    %35 = arith.maximumf %33, %34 : vector<16x128xf32>
    %36 = arith.truncf %35 : vector<16x128xf32> to vector<16x128xbf16>
    %c0_13 = arith.constant 0 : index
    %c0_14 = arith.constant 0 : index
    %37 = vector.load %arg7[%c0_13, %c0_14] : memref<128x1024xbf16, #tpu.memory_space<vmem>>, vector<128x1024xbf16>
    %cst_15 = arith.constant dense<0.000000e+00> : vector<16x1024xf32>
    %38 = tpu.matmul %36, %37, %cst_15 {dimension_numbers = #tpu.dot_dimension_numbers<[1], [0], [0], [1], [0, 0, 1, 1], [], []>} : vector<16x128xbf16>, vector<128x1024xbf16>, vector<16x1024xf32> -> vector<16x1024xf32>
    %c0_16 = arith.constant 0 : index
    %c0_17 = arith.constant 0 : index
    %39 = vector.load %arg8[%c0_16, %c0_17] : memref<1x1024xf32, #tpu.memory_space<vmem>>, vector<1x1024xf32>
    %40 = vector.broadcast %39 : vector<1x1024xf32> to vector<16x1024xf32>
    %41 = arith.addf %38, %40 : vector<16x1024xf32>
    %cst_18 = arith.constant 0.000000e+00 : f32
    %42 = vector.broadcast %cst_18 : f32 to vector<16x1024xf32>
    %43 = arith.maximumf %41, %42 : vector<16x1024xf32>
    %c0_19 = arith.constant 0 : index
    %c0_20 = arith.constant 0 : index
    %44 = vector.load %arg10[%c0_19, %c0_20] : memref<1x1024xf32, #tpu.memory_space<vmem>>, vector<1x1024xf32>
    %cst_21 = arith.constant dense<0xFF800000> : vector<1024xf32>
    %45 = vector.multi_reduction <maximumf>, %43, %cst_21 [0] : vector<16x1024xf32> to vector<1024xf32>
    %46 = vector.shape_cast %45 : vector<1024xf32> to vector<1x1024xf32>
    %47 = arith.maximumf %44, %46 : vector<1x1024xf32>
    %c0_22 = arith.constant 0 : index
    %c0_23 = arith.constant 0 : index
    %48 = vector.load %arg10[%c0_22, %c0_23] : memref<1x1024xf32, #tpu.memory_space<vmem>>, vector<1x1024xf32>
    tpu.vector_store %arg10[%c0_22, %c0_23], %47 {strides = array<i32>} : memref<1x1024xf32, #tpu.memory_space<vmem>>, vector<1x1024xf32>,
    %c0_i32_24 = arith.constant 0 : i32
    %49 = arith.cmpi eq, %arg1, %c0_i32_24 : i32
    %50 = arith.extui %49 : i1 to i32
    %c0_i32_25 = arith.constant 0 : i32
    %51 = arith.cmpi ne, %50, %c0_i32_25 : i32
    scf.if %51 {
      %c0_26 = arith.constant 0 : index
      %c0_27 = arith.constant 0 : index
      %52 = vector.load %arg10[%c0_26, %c0_27] : memref<1x1024xf32, #tpu.memory_space<vmem>>, vector<1x1024xf32>
      %53 = vector.shape_cast %52 : vector<1x1024xf32> to vector<1x1x1024xf32>
      %c0_28 = arith.constant 0 : index
      %c0_29 = arith.constant 0 : index
      %c0_30 = arith.constant 0 : index
      %54 = vector.load %arg9[%c0_28, %c0_29, %c0_30] : memref<1x1x1024xf32, #tpu.memory_space<vmem>>, vector<1x1x1024xf32>
      tpu.vector_store %arg9[%c0_28, %c0_29, %c0_30], %53 {strides = array<i32>} : memref<1x1x1024xf32, #tpu.memory_space<vmem>>, vector<1x1x1024xf32>,
    } else {
    }
    return
  }
  func.func @transform_0(%arg0: i32, %arg1: i32) -> (i32, i32, i32) {
    %c0_i32 = arith.constant 0 : i32
    %c0_i32_0 = arith.constant 0 : i32
    return %arg0, %arg1, %c0_i32 : i32, i32, i32
  }
  func.func @transform_1(%arg0: i32, %arg1: i32) -> (i32, i32) {
    %c0_i32 = arith.constant 0 : i32
    %c0_i32_0 = arith.constant 0 : i32
    %c0_i32_1 = arith.constant 0 : i32
    return %c0_i32, %c0_i32_0 : i32, i32
  }
  func.func @transform_2(%arg0: i32, %arg1: i32) -> (i32, i32) {
    %c0_i32 = arith.constant 0 : i32
    %c0_i32_0 = arith.constant 0 : i32
    %c0_i32_1 = arith.constant 0 : i32
    return %c0_i32, %c0_i32_0 : i32, i32
  }
  func.func @transform_3(%arg0: i32, %arg1: i32) -> (i32, i32) {
    %c0_i32 = arith.constant 0 : i32
    %c0_i32_0 = arith.constant 0 : i32
    %c0_i32_1 = arith.constant 0 : i32
    return %c0_i32, %c0_i32_0 : i32, i32
  }
  func.func @transform_4(%arg0: i32, %arg1: i32) -> (i32, i32) {
    %c0_i32 = arith.constant 0 : i32
    %c0_i32_0 = arith.constant 0 : i32
    %c0_i32_1 = arith.constant 0 : i32
    return %c0_i32, %c0_i32_0 : i32, i32
  }
  func.func @transform_5(%arg0: i32, %arg1: i32) -> (i32, i32) {
    %c0_i32 = arith.constant 0 : i32
    %c0_i32_0 = arith.constant 0 : i32
    %c0_i32_1 = arith.constant 0 : i32
    return %c0_i32, %c0_i32_0 : i32, i32
  }
  func.func @transform_6(%arg0: i32, %arg1: i32) -> (i32, i32) {
    %c0_i32 = arith.constant 0 : i32
    %c0_i32_0 = arith.constant 0 : i32
    %c0_i32_1 = arith.constant 0 : i32
    return %c0_i32, %c0_i32_0 : i32, i32
  }
  func.func @transform_7(%arg0: i32, %arg1: i32) -> (i32, i32, i32) {
    %c0_i32 = arith.constant 0 : i32
    %c0_i32_0 = arith.constant 0 : i32
    %c0_i32_1 = arith.constant 0 : i32
    return %arg0, %c0_i32, %c0_i32_0 : i32, i32, i32
  }
}

</mosaic_0001>

<llo_original>
// kernel: tpu_custom_call.1
$region0: #{tpu_custom_call.1}
  #allocation0 [shape = 'u32[]', space=smem, size = 0x4, offset = 0x4, fixed_abs, tag = 'smem constant byte address 0x4 - core index']
  #allocation1 [shape = 'u32[72,128]{1,0:T(1,128)}', space=vmem, size = 0x9000, scoped, tag = 'internal scratch']
  #allocation2 [shape = 'f32[1,1024]{1,0:T(1,128)}', space=vmem, size = 0x1000, scoped, tag = 'scratch operand']
  %s0 = inlined_call_operand.vmem [shape: f32[2,16,3], index: 0, kind: input, shape index: {}]
  %s1 = inlined_call_operand.hbm [shape: f32[3,64], index: 1, kind: input, shape index: {}]
  %s2 = inlined_call_operand.hbm [shape: f32[1,64], index: 2, kind: input, shape index: {}]
  %s3 = inlined_call_operand.vmem [shape: bf16[64,128], index: 3, kind: input, shape index: {}]
  %s4 = inlined_call_operand.vmem [shape: f32[1,128], index: 4, kind: input, shape index: {}]
  %s5 = inlined_call_operand.hbm [shape: bf16[128,1024], index: 5, kind: input, shape index: {}]
  %s6 = inlined_call_operand.vmem [shape: f32[1,1024], index: 6, kind: input, shape index: {}]
  %s7 = inlined_call_operand.hbm [shape: f32[2,1,1024], index: 7, kind: output, shape index: {}]
  %s8 = sld [smem:[#allocation0]]
  $region81: #{tpu_custom_call.1} parent=0
    _
  %s10 = ssub.s32 1, %s8
  %s11 = scalar_select 0, %s10, %s8
  $region1: #{tpu_custom_call.1} parent=0
    #allocation3 [shape = 'u8[2048]{0}', space=vmem, size = 0x800, scoped, tag = 'input window, operand 1, single buffered']
    #allocation4 [shape = 's32[2]{0}', space=sflag, size = 0x8, scoped, tag = 'scoped memory for tpu_custom_call.1']
    #allocation5 [shape = 's32[2]{0}', space=sflag, size = 0x8, scoped, tag = 'scoped memory for tpu_custom_call.1']
    #allocation6 [shape = 'u8[512]{0}', space=vmem, size = 0x400, scoped, tag = 'input window, operand 2, single buffered']
    #allocation7 [shape = 's32[1]{0}', space=sflag, size = 0x4, scoped, tag = 'scoped memory for tpu_custom_call.1']
    #allocation8 [shape = 'u8[262144]{0}', space=vmem, size = 0x40000, scoped, tag = 'input window, operand 5, single buffered']
    #allocation9 [shape = 'u8[8192]{0}', space=vmem, size = 0x2000, scoped, tag = 'output window, operand 0']
    %12 = vsyncpa [#allocation4], 0
    %13 = vsyncpa [#allocation7], 0
    %14 = vsyncpa [#allocation5], 0
    %s15 = scalar_lea.sflag [#allocation5], 1
    %16 = vsyncpa %s15, 0
    loop: start=0, step=1, limit=4
    $region2: #{tpu_custom_call.1} parent=1 // loop_pre_header
      _
    $region3: #{tpu_custom_call.1} parent=1 // loop_header
      %s18 = sphi 0, %s22
      %p19 = scmp.ge.s32.totalorder %s18, 4
      %s25 = sphi 0, %s37
      %s26 = sphi 0, %s33
      %s27 = sphi 0, %s25
      %s28 = sphi 0, %s26
      %s29 = sphi 0, %s27
      %s30 = sphi 0, %s28
      %s42 = sphi 0, %s44
      %s45 = sphi 0, %s42
      %s46 = sphi 0, %s45
      %s62 = sphi 0, %s46
      %s66 = sphi 0, %s66
      %s68 = sphi 0, %s66
      %s69 = sphi 0, %s68
      %s83 = sphi 0, %s69
      %s87 = sphi 0, %s87
      %s89 = sphi 0, %s87
      %s90 = sphi 0, %s89
      %s104 = sphi 0, %s90
      %s108 = sphi 0, %s108
      %s110 = sphi 0, %s108
      %s111 = sphi 0, %s110
      %s125 = sphi 0, %s111
      %s129 = sphi 0, %s129
      %s131 = sphi 0, %s129
      %s132 = sphi 0, %s131
      %s146 = sphi 0, %s132
      %s150 = sphi 0, %s150
      %s152 = sphi 0, %s150
      %s153 = sphi 0, %s152
      %s167 = sphi 0, %s153
      %s171 = sphi 0, %s171
      %s173 = sphi 0, %s171
      %s174 = sphi 0, %s173
      %s188 = sphi 0, %s174
      %s194 = sphi 0, %s196
      %s197 = sphi 0, %s194
      %s198 = sphi 0, %s197
      %s214 = sphi 0, %s198
    $region4: #{tpu_custom_call.1} parent=1 // loop_header_branch
      %21 = sbr.rel (%p19) target = $region8
    $region5: #{tpu_custom_call.1} parent=1 // loop_body
      %s23 = ssub.s32 %s18, 1
      %s24 = ssub.s32 %s18, 2
      %s31 = sadd.s32 1, %s26
      %p32 = scmp.ge.s32.totalorder %s31, 1
      %s33 = scalar_select %p32, 0, %s31
      %s34 = sadd.s32 1, %s25
      %s35 = scalar_select %p32, %s34, %s25
      %p36 = scmp.ge.s32.totalorder %s35, 2
      %s37 = scalar_select %p36, 0, %s35
      %s38 = ssub.s32 %s25, %s37
      %s39 = ssub.s32 %s26, %s33
      %s40 = sor.u32 %s38, %s39
      %p41 = scmp.eq.s32.totalorder %s40, 0
      %s43 = sadd.s32 %s42, 1
      %s44 = scalar_select %p41, %s42, %s43
      %p47 = pneg %p41
      %p48 = scmp.eq.s32.totalorder %s18, 1
      %p49 = por %p47, %p48
      %p50 = scmp.ne.s32.totalorder %s42, %s45
      %p51 = scmp.eq.s32.totalorder %s18, 0
      %p52 = por %p50, %p51
      %p53 = scmp.ne.s32.totalorder %s42, %s45
      %p54 = scmp.eq.s32.totalorder %s23, 1
      %p55 = por %p53, %p54
      %p56 = scmp.ne.s32.totalorder %s45, %s46
      %p57 = scmp.eq.s32.totalorder %s23, 0
      %p58 = por %p56, %p57
      %p59 = scmp.ne.s32.totalorder %s45, %s46
      %p60 = scmp.eq.s32.totalorder %s24, 1
      %p61 = por %p59, %p60
      %p63 = scmp.ne.s32.totalorder %s46, %s62
      %p64 = scmp.eq.s32.totalorder %s24, 0
      %p65 = por %p63, %p64
      %s67 = sadd.s32 %s66, 1
      %p70 = scmp.eq.s32.totalorder %s18, 1
      %p71 = scmp.ne.s32.totalorder %s66, %s68
      %p72 = scmp.eq.s32.totalorder %s18, 0
      %p73 = por %p71, %p72
      %p74 = scmp.ne.s32.totalorder %s66, %s68
      %p75 = scmp.eq.s32.totalorder %s23, 1
      %p76 = por %p74, %p75
      %p77 = scmp.ne.s32.totalorder %s68, %s69
      %p78 = scmp.eq.s32.totalorder %s23, 0
      %p79 = por %p77, %p78
      %p80 = scmp.ne.s32.totalorder %s68, %s69
      %p81 = scmp.eq.s32.totalorder %s24, 1
      %p82 = por %p80, %p81
      %p84 = scmp.ne.s32.totalorder %s69, %s83
      %p85 = scmp.eq.s32.totalorder %s24, 0
      %p86 = por %p84, %p85
      %s88 = sadd.s32 %s87, 1
      %p91 = scmp.eq.s32.totalorder %s18, 1
      %p92 = scmp.ne.s32.totalorder %s87, %s89
      %p93 = scmp.eq.s32.totalorder %s18, 0
      %p94 = por %p92, %p93
      %p95 = scmp.ne.s32.totalorder %s87, %s89
      %p96 = scmp.eq.s32.totalorder %s23, 1
      %p97 = por %p95, %p96
      %p98 = scmp.ne.s32.totalorder %s89, %s90
      %p99 = scmp.eq.s32.totalorder %s23, 0
      %p100 = por %p98, %p99
      %p101 = scmp.ne.s32.totalorder %s89, %s90
      %p102 = scmp.eq.s32.totalorder %s24, 1
      %p103 = por %p101, %p102
      %p105 = scmp.ne.s32.totalorder %s90, %s104
      %p106 = scmp.eq.s32.totalorder %s24, 0
      %p107 = por %p105, %p106
      %s109 = sadd.s32 %s108, 1
      %p112 = scmp.eq.s32.totalorder %s18, 1
      %p113 = scmp.ne.s32.totalorder %s108, %s110
      %p114 = scmp.eq.s32.totalorder %s18, 0
      %p115 = por %p113, %p114
      %p116 = scmp.ne.s32.totalorder %s108, %s110
      %p117 = scmp.eq.s32.totalorder %s23, 1
      %p118 = por %p116, %p117
      %p119 = scmp.ne.s32.totalorder %s110, %s111
      %p120 = scmp.eq.s32.totalorder %s23, 0
      %p121 = por %p119, %p120
      %p122 = scmp.ne.s32.totalorder %s110, %s111
      %p123 = scmp.eq.s32.totalorder %s24, 1
      %p124 = por %p122, %p123
      %p126 = scmp.ne.s32.totalorder %s111, %s125
      %p127 = scmp.eq.s32.totalorder %s24, 0
      %p128 = por %p126, %p127
      %s130 = sadd.s32 %s129, 1
      %p133 = scmp.eq.s32.totalorder %s18, 1
      %p134 = scmp.ne.s32.totalorder %s129, %s131
      %p135 = scmp.eq.s32.totalorder %s18, 0
      %p136 = por %p134, %p135
      %p137 = scmp.ne.s32.totalorder %s129, %s131
      %p138 = scmp.eq.s32.totalorder %s23, 1
      %p139 = por %p137, %p138
      %p140 = scmp.ne.s32.totalorder %s131, %s132
      %p141 = scmp.eq.s32.totalorder %s23, 0
      %p142 = por %p140, %p141
      %p143 = scmp.ne.s32.totalorder %s131, %s132
      %p144 = scmp.eq.s32.totalorder %s24, 1
      %p145 = por %p143, %p144
      %p147 = scmp.ne.s32.totalorder %s132, %s146
      %p148 = scmp.eq.s32.totalorder %s24, 0
      %p149 = por %p147, %p148
      %s151 = sadd.s32 %s150, 1
      %p154 = scmp.eq.s32.totalorder %s18, 1
      %p155 = scmp.ne.s32.totalorder %s150, %s152
      %p156 = scmp.eq.s32.totalorder %s18, 0
      %p157 = por %p155, %p156
      %p158 = scmp.ne.s32.totalorder %s150, %s152
      %p159 = scmp.eq.s32.totalorder %s23, 1
      %p160 = por %p158, %p159
      %p161 = scmp.ne.s32.totalorder %s152, %s153
      %p162 = scmp.eq.s32.totalorder %s23, 0
      %p163 = por %p161, %p162
      %p164 = scmp.ne.s32.totalorder %s152, %s153
      %p165 = scmp.eq.s32.totalorder %s24, 1
      %p166 = por %p164, %p165
      %p168 = scmp.ne.s32.totalorder %s153, %s167
      %p169 = scmp.eq.s32.totalorder %s24, 0
      %p170 = por %p168, %p169
      %s172 = sadd.s32 %s171, 1
      %p175 = scmp.eq.s32.totalorder %s18, 1
      %p176 = scmp.ne.s32.totalorder %s171, %s173
      %p177 = scmp.eq.s32.totalorder %s18, 0
      %p178 = por %p176, %p177
      %p179 = scmp.ne.s32.totalorder %s171, %s173
      %p180 = scmp.eq.s32.totalorder %s23, 1
      %p181 = por %p179, %p180
      %p182 = scmp.ne.s32.totalorder %s173, %s174
      %p183 = scmp.eq.s32.totalorder %s23, 0
      %p184 = por %p182, %p183
      %p185 = scmp.ne.s32.totalorder %s173, %s174
      %p186 = scmp.eq.s32.totalorder %s24, 1
      %p187 = por %p185, %p186
      %p189 = scmp.ne.s32.totalorder %s174, %s188
      %p190 = scmp.eq.s32.totalorder %s24, 0
      %p191 = por %p189, %p190
      %s192 = ssub.s32 %s25, %s37
      %p193 = scmp.eq.s32.totalorder %s192, 0
      %s195 = sadd.s32 %s194, 1
      %s196 = scalar_select %p193, %s194, %s195
      %p199 = pneg %p193
      %p200 = scmp.eq.s32.totalorder %s18, 1
      %p201 = por %p199, %p200
      %p202 = scmp.ne.s32.totalorder %s194, %s197
      %p203 = scmp.eq.s32.totalorder %s18, 0
      %p204 = por %p202, %p203
      %p205 = scmp.ne.s32.totalorder %s194, %s197
      %p206 = scmp.eq.s32.totalorder %s23, 1
      %p207 = por %p205, %p206
      %p208 = scmp.ne.s32.totalorder %s197, %s198
      %p209 = scmp.eq.s32.totalorder %s23, 0
      %p210 = por %p208, %p209
      %p211 = scmp.ne.s32.totalorder %s197, %s198
      %p212 = scmp.eq.s32.totalorder %s24, 1
      %p213 = por %p211, %p212
      %p215 = scmp.ne.s32.totalorder %s198, %s214
      %p216 = scmp.eq.s32.totalorder %s24, 0
      %p217 = por %p215, %p216
      %p218 = scmp.le.s32.totalorder 1, %s18
      %p219 = scmp.lt.s32.totalorder %s18, 3
      %p220 = pnand %p218, %p219
      %p221 = pneg %p220
      // Predicated region
      $region9: #{tpu_custom_call.1} parent=5 // pred_check
        _
      $region10: #{tpu_custom_call.1} parent=5 // pred_check_branch
        %223 = sbr.rel (%p220) target = $region12
      $region11: #{tpu_custom_call.1} parent=5 // pred_region
        %s224 = ssub.s32 %s18, 1
        // Predicated region
        $region13: #{tpu_custom_call.1} parent=11 // pred_check
          %p225 = pneg %p79
        $region14: #{tpu_custom_call.1} parent=11 // pred_check_branch
          %227 = sbr.rel (%p225) target = $region16
        $region15: #{tpu_custom_call.1} parent=11 // pred_region
          %229 = vsyncadd [#allocation4], 0
          %s231 = sshll.u32 %s1, 4
          %s232 = int_to_ptr.hbm [resolvable:$true] %s231
          %s233 = sshll.u32 [#allocation3], 4
          %s234 = int_to_ptr.vmem [resolvable:$true] %s233
          %236 = dma.hbm_to_vmem [thread:$0]  %s232, 64, %s234, [#allocation4]
        $region16: #{tpu_custom_call.1} parent=11 // pred_fallthru
          _
        // Predicated region
        $region17: #{tpu_custom_call.1} parent=11 // pred_check
          %p237 = pneg %p100
        $region18: #{tpu_custom_call.1} parent=11 // pred_check_branch
          %239 = sbr.rel (%p237) target = $region20
        $region19: #{tpu_custom_call.1} parent=11 // pred_region
          %241 = vsyncadd [#allocation7], 0
          %s243 = sshll.u32 %s2, 4
          %s244 = int_to_ptr.hbm [resolvable:$true] %s243
          %s245 = sshll.u32 [#allocation6], 4
          %s246 = int_to_ptr.vmem [resolvable:$true] %s245
          %248 = dma.hbm_to_vmem [thread:$0]  %s244, 16, %s246, [#allocation7]
        $region20: #{tpu_custom_call.1} parent=11 // pred_fallthru
          _
        // Predicated region
        $region21: #{tpu_custom_call.1} parent=11 // pred_check
          %p249 = pneg %p121
        $region22: #{tpu_custom_call.1} parent=11 // pred_check_branch
          %251 = sbr.rel (%p249) target = $region24
        $region23: #{tpu_custom_call.1} parent=11 // pred_region
          _
        $region24: #{tpu_custom_call.1} parent=11 // pred_fallthru
          _
        // Predicated region
        $region25: #{tpu_custom_call.1} parent=11 // pred_check
          %p252 = pneg %p142
        $region26: #{tpu_custom_call.1} parent=11 // pred_check_branch
          %254 = sbr.rel (%p252) target = $region28
        $region27: #{tpu_custom_call.1} parent=11 // pred_region
          _
        $region28: #{tpu_custom_call.1} parent=11 // pred_fallthru
          _
        // Predicated region
        $region29: #{tpu_custom_call.1} parent=11 // pred_check
          %p255 = pneg %p163
        $region30: #{tpu_custom_call.1} parent=11 // pred_check_branch
          %257 = sbr.rel (%p255) target = $region32
        $region31: #{tpu_custom_call.1} parent=11 // pred_region
          %259 = vsyncadd [#allocation7], 0
          %s260 = sshll.u32 %s5, 4
          %s261 = int_to_ptr.hbm [resolvable:$true] %s260
          %s262 = sshll.u32 [#allocation8], 4
          %s263 = int_to_ptr.vmem [resolvable:$true] %s262
          %268 = dma.hbm_to_vmem [thread:$0]  %s261, 8192, %s263, [#allocation7], 512, 512, 32
        $region32: #{tpu_custom_call.1} parent=11 // pred_fallthru
          _
        // Predicated region
        $region33: #{tpu_custom_call.1} parent=11 // pred_check
          %p269 = pneg %p184
        $region34: #{tpu_custom_call.1} parent=11 // pred_check_branch
          %271 = sbr.rel (%p269) target = $region36
        $region35: #{tpu_custom_call.1} parent=11 // pred_region
          _
        $region36: #{tpu_custom_call.1} parent=11 // pred_fallthru
          _
      $region12: #{tpu_custom_call.1} parent=5 // pred_fallthru
        _
      %p272 = scmp.lt.s32.totalorder %s18, 2
      // Predicated region
      $region37: #{tpu_custom_call.1} parent=5 // pred_check
        %p273 = pneg %p272
      $region38: #{tpu_custom_call.1} parent=5 // pred_check_branch
        %275 = sbr.rel (%p273) target = $region40
      $region39: #{tpu_custom_call.1} parent=5 // pred_region
        // Predicated region
        $region41: #{tpu_custom_call.1} parent=39 // pred_check
          %p276 = pneg %p52
        $region42: #{tpu_custom_call.1} parent=39 // pred_check_branch
          %278 = sbr.rel (%p276) target = $region44
        $region43: #{tpu_custom_call.1} parent=39 // pred_region
          %s279 = smul.u32 2, %s26
          %p280 = scmp.lt.s32.totalorder %s25, 1
          %s281 = scalar_select %p280, %s25, 1
          %p282 = scmp.lt.s32.totalorder %s279, 1
          %s283 = scalar_select %p282, %s279, 1
          %s284 = smul.addr %s281, 2
          %s285 = sadd.s32 %s283, %s284
          %s286 = smul.addr %s285, 8
          %s287 = scalar_lea.vmem %s0, %s286
          %s288 = smul.u32 2, %s26
        $region44: #{tpu_custom_call.1} parent=39 // pred_fallthru
          _
      $region40: #{tpu_custom_call.1} parent=5 // pred_fallthru
        _
      %p289 = scmp.le.s32.totalorder 1, %s18
      %p290 = scmp.lt.s32.totalorder %s18, 3
      %p291 = pnand %p289, %p290
      %p292 = pneg %p291
      // Predicated region
      $region45: #{tpu_custom_call.1} parent=5 // pred_check
        _
      $region46: #{tpu_custom_call.1} parent=5 // pred_check_branch
        %294 = sbr.rel (%p291) target = $region48
      $region47: #{tpu_custom_call.1} parent=5 // pred_region
        %s295 = ssub.s32 %s18, 1
        // Predicated region
        $region49: #{tpu_custom_call.1} parent=47 // pred_check
          %p296 = pneg %p79
        $region50: #{tpu_custom_call.1} parent=47 // pred_check_branch
          %298 = sbr.rel (%p296) target = $region52
        $region51: #{tpu_custom_call.1} parent=47 // pred_region
          %300 = dma.done [#allocation4], 64
        $region52: #{tpu_custom_call.1} parent=47 // pred_fallthru
          _
        // Predicated region
        $region53: #{tpu_custom_call.1} parent=47 // pred_check
          %p301 = pneg %p100
        $region54: #{tpu_custom_call.1} parent=47 // pred_check_branch
          %303 = sbr.rel (%p301) target = $region56
        $region55: #{tpu_custom_call.1} parent=47 // pred_region
          %305 = dma.done [#allocation7], 16
        $region56: #{tpu_custom_call.1} parent=47 // pred_fallthru
          _
        // Predicated region
        $region57: #{tpu_custom_call.1} parent=47 // pred_check
          %p306 = pneg %p163
        $region58: #{tpu_custom_call.1} parent=47 // pred_check_branch
          %308 = sbr.rel (%p306) target = $region60
        $region59: #{tpu_custom_call.1} parent=47 // pred_region
          %310 = dma.done [#allocation7], 8192
        $region60: #{tpu_custom_call.1} parent=47 // pred_fallthru
          _
        %s311 = smul.u32 2, %s28
        %p312 = scmp.lt.s32.totalorder %s27, 1
        %s313 = scalar_select %p312, %s27, 1
        %p314 = scmp.lt.s32.totalorder %s311, 1
        %s315 = scalar_select %p314, %s311, 1
        %s316 = smul.addr %s313, 2
        %s317 = sadd.s32 %s315, %s316
        %s318 = smul.addr %s317, 8
        %s319 = scalar_lea.vmem %s0, %s318
        %p320 = pneg %p58
        %p321 = pneg %p55
        %p322 = pneg %p79
        %p323 = pneg %p76
        %p324 = pneg %p100
        %p325 = pneg %p97
        %p326 = pneg %p121
        %p327 = pneg %p118
        %p328 = pneg %p142
        %p329 = pneg %p139
        %p330 = pneg %p163
        %p331 = pneg %p160
        %p332 = pneg %p184
        %p333 = pneg %p181
        %p334 = pneg %p210
        %p335 = pneg %p207
        %s336 = sand.u32 %s197, 1
        %s337 = scalar_lea.sflag [#allocation5], %s336
        %s338 = sand.u32 %s197, 1
        %s339 = smul.addr %s338, 8
        %s340 = scalar_lea.vmem [#allocation9], %s339
        %s341 = smul.u32 2, %s28
        %p342 = scmp.lt.s32.totalorder %s27, 1
        %s343 = scalar_select %p342, %s27, 1
        %p344 = scmp.lt.s32.totalorder %s341, 1
        %s345 = scalar_select %p344, %s341, 1
        %s346 = smul.addr %s343, 2
        %s347 = sadd.s32 %s345, %s346
        %s348 = smul.addr %s347, 8
        %s349 = scalar_lea.vmem %s0, %s348
        %s350 = smul.u32 2, %s28
        %p352 = scmp.eq.s32.totalorder %s28, 0
        // Predicated region
        $region61: #{tpu_custom_call.1} parent=47 // pred_check
          %p353 = pneg %p352
        $region62: #{tpu_custom_call.1} parent=47 // pred_check_branch
          %355 = sbr.rel (%p353) target = $region64
        $region63: #{tpu_custom_call.1} parent=47 // pred_region
          %356 = vst [vmem:[#allocation2] sm:$0xff] -inf
        $region64: #{tpu_custom_call.1} parent=47 // pred_fallthru
          _
        %v357 = vld [vmem:[%s349] sm:$0xff]
        %v358 = vld [vmem:[%s349 + $0x8] sm:$0xff]
        %v359 = vld [vmem:[#allocation3] sm:$0x7]
        %361 = vset.pattern.permute.xlu0 0
        %362 = vperm.xlu0 %361, %v357
        %v363 = vpop.permute.xlu0 %362
        %366 = vset.pattern.permute.xlu0 0
        %367 = vperm.xlu0 %366, %v358
        %v368 = vpop.permute.xlu0 %367
        %v370 = vperm.slane %v359, 0
        %v371 = vmul.f32 %v363, %v370
        %v372 = vmul.f32 %v368, %v370
        %373 = vset.pattern.permute.xlu0 1
        %374 = vperm.xlu0 %373, %v357
        %v375 = vpop.permute.xlu0 %374
        %377 = vset.pattern.permute.xlu0 1
        %378 = vperm.xlu0 %377, %v358
        %v379 = vpop.permute.xlu0 %378
        %v381 = vperm.slane %v359, 1
        %v382 = vmul.f32 %v375, %v381
        %v383 = vmul.f32 %v379, %v381
        %v384 = vadd.f32 %v371, %v382
        %v385 = vadd.f32 %v372, %v383
        %386 = vset.pattern.permute.xlu0 2
        %387 = vperm.xlu0 %386, %v357
        %v388 = vpop.permute.xlu0 %387
        %390 = vset.pattern.permute.xlu0 2
        %391 = vperm.xlu0 %390, %v358
        %v392 = vpop.permute.xlu0 %391
        %v394 = vperm.slane %v359, 2
        %v395 = vmul.f32 %v388, %v394
        %v396 = vmul.f32 %v392, %v394
        %v397 = vadd.f32 %v384, %v395
        %v398 = vadd.f32 %v385, %v396
        %v399 = vld [vmem:[#allocation6] sm:$0x1]
        %v401 = vperm.slane %v399, 0
        %v403 = vadd.f32 %v397, %v401
        %v404 = vadd.f32 %v398, %v401
        %v405 = vmax.f32 %v403, 0.0
        %v406 = vmax.f32 %v404, 0.0
        %v407 = vpack.c.bf16 %v406, %v405
        %v408 = vld [vmem:[%s3] sm:$0xf]
        %v409 = vld [vmem:[%s3 + $0x4] sm:$0xf]
        %v410 = vld [vmem:[%s3 + $0x8] sm:$0xf]
        %v411 = vld [vmem:[%s3 + $0xc] sm:$0xf]
        %v412 = vld [vmem:[%s3 + $0x10] sm:$0xf]
        %v413 = vld [vmem:[%s3 + $0x14] sm:$0xf]
        %v414 = vld [vmem:[%s3 + $0x18] sm:$0xf]
        %v415 = vld [vmem:[%s3 + $0x1c] sm:$0xf]
        %v416 = vld [vmem:[%s4] sm:$0x1]
        %v418 = vperm.slane %v416, 0
        %v428 = vunpack.c.l.b16 %v408
        %v429 = vunpack.c.l.b16 %v409
        %v430 = vunpack.c.l.b16 %v410
        %v431 = vunpack.c.l.b16 %v411
        %v432 = vunpack.c.l.b16 %v412
        %v433 = vunpack.c.l.b16 %v413
        %v434 = vunpack.c.l.b16 %v414
        %v435 = vunpack.c.l.b16 %v415
        %v436 = vpack.c.b16 %v429, %v428
        %v437 = vpack.c.b16 %v431, %v430
        %v438 = vpack.c.b16 %v433, %v432
        %v439 = vpack.c.b16 %v435, %v434
        %vm444 = vcmask 523264
        %v446 = vsel %vm444, %v407, 0
        %448 = vmatpush.bf16.msra.mxu0 0
        %449 = vmatpush.bf16.msra.mxu0 0
        %450 = vmatpush.bf16.msra.mxu0 0
        %451 = vmatpush.bf16.msra.mxu0 0
        %452 = vmatpush.bf16.msra.mxu0 %v439
        %453 = vmatpush.bf16.msra.mxu0 %v438
        %454 = vmatpush.bf16.msra.mxu0 %v437
        %455 = vmatpush.bf16.msra.mxu0 %v436
        %456 = vmatmul.bf16.gmra.mxu0 %v446
        %v457 = vpop.f32.mrf.mxu0
        %v458 = vadd.f32 %v418, %v457
        %v459 = vpop.f32.mrf.mxu0
        %v460 = vadd.f32 %v418, %v459
        %461 = vdwg.mxu0
        %v462 = vmax.f32 %v458, 0.0
        %v463 = vmax.f32 %v460, 0.0
        %v464 = vpack.c.bf16 %v463, %v462
        %v465 = vld [vmem:[#allocation8] sm:$0xff]
        %v466 = vld [vmem:[#allocation8 + $0x8] sm:$0xff]
        %v467 = vld [vmem:[#allocation8 + $0x10] sm:$0xff]
        %v468 = vld [vmem:[#allocation8 + $0x18] sm:$0xff]
        %v469 = vld [vmem:[#allocation8 + $0x20] sm:$0xff]
        %v470 = vld [vmem:[#allocation8 + $0x28] sm:$0xff]
        %v471 = vld [vmem:[#allocation8 + $0x30] sm:$0xff]
        %v472 = vld [vmem:[#allocation8 + $0x38] sm:$0xff]
        %v473 = vld [vmem:[#allocation8 + $0x40] sm:$0xff]
        %v474 = vld [vmem:[#allocation8 + $0x48] sm:$0xff]
        %v475 = vld [vmem:[#allocation8 + $0x50] sm:$0xff]
        %v476 = vld [vmem:[#allocation8 + $0x58] sm:$0xff]
        %v477 = vld [vmem:[#allocation8 + $0x60] sm:$0xff]
        %v478 = vld [vmem:[#allocation8 + $0x68] sm:$0xff]
        %v479 = vld [vmem:[#allocation8 + $0x70] sm:$0xff]
        %v480 = vld [vmem:[#allocation8 + $0x78] sm:$0xff]
        %v481 = vld [vmem:[#allocation8 + $0x80] sm:$0xff]
        %v482 = vld [vmem:[#allocation8 + $0x88] sm:$0xff]
        %v483 = vld [vmem:[#allocation8 + $0x90] sm:$0xff]
        %v484 = vld [vmem:[#allocation8 + $0x98] sm:$0xff]
        %v485 = vld [vmem:[#allocation8 + $0xa0] sm:$0xff]
        %v486 = vld [vmem:[#allocation8 + $0xa8] sm:$0xff]
        %v487 = vld [vmem:[#allocation8 + $0xb0] sm:$0xff]
        %v488 = vld [vmem:[#allocation8 + $0xb8] sm:$0xff]
        %v489 = vld [vmem:[#allocation8 + $0xc0] sm:$0xff]
        %v490 = vld [vmem:[#allocation8 + $0xc8] sm:$0xff]
        %v491 = vld [vmem:[#allocation8 + $0xd0] sm:$0xff]
        %v492 = vld [vmem:[#allocation8 + $0xd8] sm:$0xff]
        %v493 = vld [vmem:[#allocation8 + $0xe0] sm:$0xff]
        %v494 = vld [vmem:[#allocation8 + $0xe8] sm:$0xff]
        %v495 = vld [vmem:[#allocation8 + $0xf0] sm:$0xff]
        %v496 = vld [vmem:[#allocation8 + $0xf8] sm:$0xff]
        %v497 = vld [vmem:[#allocation8 + $0x100] sm:$0xff]
        %v498 = vld [vmem:[#allocation8 + $0x108] sm:$0xff]
        %v499 = vld [vmem:[#allocation8 + $0x110] sm:$0xff]
        %v500 = vld [vmem:[#allocation8 + $0x118] sm:$0xff]
        %v501 = vld [vmem:[#allocation8 + $0x120] sm:$0xff]
        %v502 = vld [vmem:[#allocation8 + $0x128] sm:$0xff]
        %v503 = vld [vmem:[#allocation8 + $0x130] sm:$0xff]
        %v504 = vld [vmem:[#allocation8 + $0x138] sm:$0xff]
        %v505 = vld [vmem:[#allocation8 + $0x140] sm:$0xff]
        %v506 = vld [vmem:[#allocation8 + $0x148] sm:$0xff]
        %v507 = vld [vmem:[#allocation8 + $0x150] sm:$0xff]
        %v508 = vld [vmem:[#allocation8 + $0x158] sm:$0xff]
        %v509 = vld [vmem:[#allocation8 + $0x160] sm:$0xff]
        %v510 = vld [vmem:[#allocation8 + $0x168] sm:$0xff]
        %v511 = vld [vmem:[#allocation8 + $0x170] sm:$0xff]
        %v512 = vld [vmem:[#allocation8 + $0x178] sm:$0xff]
        %v513 = vld [vmem:[#allocation8 + $0x180] sm:$0xff]
        %v514 = vld [vmem:[#allocation8 + $0x188] sm:$0xff]
        %v515 = vld [vmem:[#allocation8 + $0x190] sm:$0xff]
        %v516 = vld [vmem:[#allocation8 + $0x198] sm:$0xff]
        %v517 = vld [vmem:[#allocation8 + $0x1a0] sm:$0xff]
        %v518 = vld [vmem:[#allocation8 + $0x1a8] sm:$0xff]
        %v519 = vld [vmem:[#allocation8 + $0x1b0] sm:$0xff]
        %v520 = vld [vmem:[#allocation8 + $0x1b8] sm:$0xff]
        %v521 = vld [vmem:[#allocation8 + $0x1c0] sm:$0xff]
        %v522 = vld [vmem:[#allocation8 + $0x1c8] sm:$0xff]
        %v523 = vld [vmem:[#allocation8 + $0x1d0] sm:$0xff]
        %v524 = vld [vmem:[#allocation8 + $0x1d8] sm:$0xff]
        %v525 = vld [vmem:[#allocation8 + $0x1e0] sm:$0xff]
        %v526 = vld [vmem:[#allocation8 + $0x1e8] sm:$0xff]
        %v527 = vld [vmem:[#allocation8 + $0x1f0] sm:$0xff]
        %v528 = vld [vmem:[#allocation8 + $0x1f8] sm:$0xff]
        %v529 = vld [vmem:[%s6] sm:$0xff]
        %v531 = vperm.slane %v529, 0
        %v532 = vperm.slane %v529, 1
        %v533 = vperm.slane %v529, 2
        %v534 = vperm.slane %v529, 3
        %v535 = vperm.slane %v529, 4
        %v536 = vperm.slane %v529, 5
        %v537 = vperm.slane %v529, 6
        %v538 = vperm.slane %v529, 7
        %v611 = vunpack.c.l.b16 %v465
        %v612 = vunpack.c.h.b16 %v465
        %v613 = vunpack.c.l.b16 %v466
        %v614 = vunpack.c.h.b16 %v466
        %v615 = vunpack.c.l.b16 %v467
        %v616 = vunpack.c.h.b16 %v467
        %v617 = vunpack.c.l.b16 %v468
        %v618 = vunpack.c.h.b16 %v468
        %v619 = vunpack.c.l.b16 %v469
        %v620 = vunpack.c.h.b16 %v469
        %v621 = vunpack.c.l.b16 %v470
        %v622 = vunpack.c.h.b16 %v470
        %v623 = vunpack.c.l.b16 %v471
        %v624 = vunpack.c.h.b16 %v471
        %v625 = vunpack.c.l.b16 %v472
        %v626 = vunpack.c.h.b16 %v472
        %v627 = vunpack.c.l.b16 %v473
        %v628 = vunpack.c.h.b16 %v473
        %v629 = vunpack.c.l.b16 %v474
        %v630 = vunpack.c.h.b16 %v474
        %v631 = vunpack.c.l.b16 %v475
        %v632 = vunpack.c.h.b16 %v475
        %v633 = vunpack.c.l.b16 %v476
        %v634 = vunpack.c.h.b16 %v476
        %v635 = vunpack.c.l.b16 %v477
        %v636 = vunpack.c.h.b16 %v477
        %v637 = vunpack.c.l.b16 %v478
        %v638 = vunpack.c.h.b16 %v478
        %v639 = vunpack.c.l.b16 %v479
        %v640 = vunpack.c.h.b16 %v479
        %v641 = vunpack.c.l.b16 %v480
        %v642 = vunpack.c.h.b16 %v480
        %v643 = vunpack.c.l.b16 %v481
        %v644 = vunpack.c.h.b16 %v481
        %v645 = vunpack.c.l.b16 %v482
        %v646 = vunpack.c.h.b16 %v482
        %v647 = vunpack.c.l.b16 %v483
        %v648 = vunpack.c.h.b16 %v483
        %v649 = vunpack.c.l.b16 %v484
        %v650 = vunpack.c.h.b16 %v484
        %v651 = vunpack.c.l.b16 %v485
        %v652 = vunpack.c.h.b16 %v485
        %v653 = vunpack.c.l.b16 %v486
        %v654 = vunpack.c.h.b16 %v486
        %v655 = vunpack.c.l.b16 %v487
        %v656 = vunpack.c.h.b16 %v487
        %v657 = vunpack.c.l.b16 %v488
        %v658 = vunpack.c.h.b16 %v488
        %v659 = vunpack.c.l.b16 %v489
        %v660 = vunpack.c.h.b16 %v489
        %v661 = vunpack.c.l.b16 %v490
        %v662 = vunpack.c.h.b16 %v490
        %v663 = vunpack.c.l.b16 %v491
        %v664 = vunpack.c.h.b16 %v491
        %v665 = vunpack.c.l.b16 %v492
        %v666 = vunpack.c.h.b16 %v492
        %v667 = vunpack.c.l.b16 %v493
        %v668 = vunpack.c.h.b16 %v493
        %v669 = vunpack.c.l.b16 %v494
        %v670 = vunpack.c.h.b16 %v494
        %v671 = vunpack.c.l.b16 %v495
        %v672 = vunpack.c.h.b16 %v495
        %v673 = vunpack.c.l.b16 %v496
        %v674 = vunpack.c.h.b16 %v496
        %v675 = vunpack.c.l.b16 %v497
        %v676 = vunpack.c.h.b16 %v497
        %v677 = vunpack.c.l.b16 %v498
        %v678 = vunpack.c.h.b16 %v498
        %v679 = vunpack.c.l.b16 %v499
        %v680 = vunpack.c.h.b16 %v499
        %v681 = vunpack.c.l.b16 %v500
        %v682 = vunpack.c.h.b16 %v500
        %v683 = vunpack.c.l.b16 %v501
        %v684 = vunpack.c.h.b16 %v501
        %v685 = vunpack.c.l.b16 %v502
        %v686 = vunpack.c.h.b16 %v502
        %v687 = vunpack.c.l.b16 %v503
        %v688 = vunpack.c.h.b16 %v503
        %v689 = vunpack.c.l.b16 %v504
        %v690 = vunpack.c.h.b16 %v504
        %v691 = vunpack.c.l.b16 %v505
        %v692 = vunpack.c.h.b16 %v505
        %v693 = vunpack.c.l.b16 %v506
        %v694 = vunpack.c.h.b16 %v506
        %v695 = vunpack.c.l.b16 %v507
        %v696 = vunpack.c.h.b16 %v507
        %v697 = vunpack.c.l.b16 %v508
        %v698 = vunpack.c.h.b16 %v508
        %v699 = vunpack.c.l.b16 %v509
        %v700 = vunpack.c.h.b16 %v509
        %v701 = vunpack.c.l.b16 %v510
        %v702 = vunpack.c.h.b16 %v510
        %v703 = vunpack.c.l.b16 %v511
        %v704 = vunpack.c.h.b16 %v511
        %v705 = vunpack.c.l.b16 %v512
        %v706 = vunpack.c.h.b16 %v512
        %v707 = vunpack.c.l.b16 %v513
        %v708 = vunpack.c.h.b16 %v513
        %v709 = vunpack.c.l.b16 %v514
        %v710 = vunpack.c.h.b16 %v514
        %v711 = vunpack.c.l.b16 %v515
        %v712 = vunpack.c.h.b16 %v515
        %v713 = vunpack.c.l.b16 %v516
        %v714 = vunpack.c.h.b16 %v516
        %v715 = vunpack.c.l.b16 %v517
        %v716 = vunpack.c.h.b16 %v517
        %v717 = vunpack.c.l.b16 %v518
        %v718 = vunpack.c.h.b16 %v518
        %v719 = vunpack.c.l.b16 %v519
        %v720 = vunpack.c.h.b16 %v519
        %v721 = vunpack.c.l.b16 %v520
        %v722 = vunpack.c.h.b16 %v520
        %v723 = vunpack.c.l.b16 %v521
        %v724 = vunpack.c.h.b16 %v521
        %v725 = vunpack.c.l.b16 %v522
        %v726 = vunpack.c.h.b16 %v522
        %v727 = vunpack.c.l.b16 %v523
        %v728 = vunpack.c.h.b16 %v523
        %v729 = vunpack.c.l.b16 %v524
        %v730 = vunpack.c.h.b16 %v524
        %v731 = vunpack.c.l.b16 %v525
        %v732 = vunpack.c.h.b16 %v525
        %v733 = vunpack.c.l.b16 %v526
        %v734 = vunpack.c.h.b16 %v526
        %v735 = vunpack.c.l.b16 %v527
        %v736 = vunpack.c.h.b16 %v527
        %v737 = vunpack.c.l.b16 %v528
        %v738 = vunpack.c.h.b16 %v528
        %v739 = vpack.c.b16 %v619, %v611
        %v740 = vpack.c.b16 %v620, %v612
        %v741 = vpack.c.b16 %v621, %v613
        %v742 = vpack.c.b16 %v622, %v614
        %v743 = vpack.c.b16 %v623, %v615
        %v744 = vpack.c.b16 %v624, %v616
        %v745 = vpack.c.b16 %v625, %v617
        %v746 = vpack.c.b16 %v626, %v618
        %v747 = vpack.c.b16 %v635, %v627
        %v748 = vpack.c.b16 %v636, %v628
        %v749 = vpack.c.b16 %v637, %v629
        %v750 = vpack.c.b16 %v638, %v630
        %v751 = vpack.c.b16 %v639, %v631
        %v752 = vpack.c.b16 %v640, %v632
        %v753 = vpack.c.b16 %v641, %v633
        %v754 = vpack.c.b16 %v642, %v634
        %v755 = vpack.c.b16 %v651, %v643
        %v756 = vpack.c.b16 %v652, %v644
        %v757 = vpack.c.b16 %v653, %v645
        %v758 = vpack.c.b16 %v654, %v646
        %v759 = vpack.c.b16 %v655, %v647
        %v760 = vpack.c.b16 %v656, %v648
        %v761 = vpack.c.b16 %v657, %v649
        %v762 = vpack.c.b16 %v658, %v650
        %v763 = vpack.c.b16 %v667, %v659
        %v764 = vpack.c.b16 %v668, %v660
        %v765 = vpack.c.b16 %v669, %v661
        %v766 = vpack.c.b16 %v670, %v662
        %v767 = vpack.c.b16 %v671, %v663
        %v768 = vpack.c.b16 %v672, %v664
        %v769 = vpack.c.b16 %v673, %v665
        %v770 = vpack.c.b16 %v674, %v666
        %v771 = vpack.c.b16 %v683, %v675
        %v772 = vpack.c.b16 %v684, %v676
        %v773 = vpack.c.b16 %v685, %v677
        %v774 = vpack.c.b16 %v686, %v678
        %v775 = vpack.c.b16 %v687, %v679
        %v776 = vpack.c.b16 %v688, %v680
        %v777 = vpack.c.b16 %v689, %v681
        %v778 = vpack.c.b16 %v690, %v682
        %v779 = vpack.c.b16 %v699, %v691
        %v780 = vpack.c.b16 %v700, %v692
        %v781 = vpack.c.b16 %v701, %v693
        %v782 = vpack.c.b16 %v702, %v694
        %v783 = vpack.c.b16 %v703, %v695
        %v784 = vpack.c.b16 %v704, %v696
        %v785 = vpack.c.b16 %v705, %v697
        %v786 = vpack.c.b16 %v706, %v698
        %v787 = vpack.c.b16 %v715, %v707
        %v788 = vpack.c.b16 %v716, %v708
        %v789 = vpack.c.b16 %v717, %v709
        %v790 = vpack.c.b16 %v718, %v710
        %v791 = vpack.c.b16 %v719, %v711
        %v792 = vpack.c.b16 %v720, %v712
        %v793 = vpack.c.b16 %v721, %v713
        %v794 = vpack.c.b16 %v722, %v714
        %v795 = vpack.c.b16 %v731, %v723
        %v796 = vpack.c.b16 %v732, %v724
        %v797 = vpack.c.b16 %v733, %v725
        %v798 = vpack.c.b16 %v734, %v726
        %v799 = vpack.c.b16 %v735, %v727
        %v800 = vpack.c.b16 %v736, %v728
        %v801 = vpack.c.b16 %v737, %v729
        %v802 = vpack.c.b16 %v738, %v730
        %867 = vmatpush.bf16.msra.mxu0 %v795
        %868 = vmatpush.bf16.msra.mxu0 %v787
        %869 = vmatpush.bf16.msra.mxu0 %v779
        %870 = vmatpush.bf16.msra.mxu0 %v771
        %871 = vmatpush.bf16.msra.mxu0 %v763
        %872 = vmatpush.bf16.msra.mxu0 %v755
        %873 = vmatpush.bf16.msra.mxu0 %v747
        %874 = vmatpush.bf16.msra.mxu0 %v739
        %875 = vmatmul.bf16.gmra.mxu0 %v464
        %v876 = vpop.f32.mrf.mxu0
        %v877 = vadd.f32 %v531, %v876
        %v878 = vpop.f32.mrf.mxu0
        %v879 = vadd.f32 %v531, %v878
        %880 = vdwg.mxu0
        %881 = vmatpush.bf16.msra.mxu0 %v796
        %882 = vmatpush.bf16.msra.mxu0 %v788
        %883 = vmatpush.bf16.msra.mxu0 %v780
        %884 = vmatpush.bf16.msra.mxu0 %v772
        %885 = vmatpush.bf16.msra.mxu0 %v764
        %886 = vmatpush.bf16.msra.mxu0 %v756
        %887 = vmatpush.bf16.msra.mxu0 %v748
        %888 = vmatpush.bf16.msra.mxu0 %v740
        %889 = vmatmul.bf16.gmra.mxu0 %v464
        %v890 = vpop.f32.mrf.mxu0
        %v891 = vadd.f32 %v532, %v890
        %v892 = vpop.f32.mrf.mxu0
        %v893 = vadd.f32 %v532, %v892
        %894 = vdwg.mxu0
        %895 = vmatpush.bf16.msra.mxu0 %v797
        %896 = vmatpush.bf16.msra.mxu0 %v789
        %897 = vmatpush.bf16.msra.mxu0 %v781
        %898 = vmatpush.bf16.msra.mxu0 %v773
        %899 = vmatpush.bf16.msra.mxu0 %v765
        %900 = vmatpush.bf16.msra.mxu0 %v757
        %901 = vmatpush.bf16.msra.mxu0 %v749
        %902 = vmatpush.bf16.msra.mxu0 %v741
        %903 = vmatmul.bf16.gmra.mxu0 %v464
        %v904 = vpop.f32.mrf.mxu0
        %v905 = vadd.f32 %v533, %v904
        %v906 = vpop.f32.mrf.mxu0
        %v907 = vadd.f32 %v533, %v906
        %908 = vdwg.mxu0
        %909 = vmatpush.bf16.msra.mxu0 %v798
        %910 = vmatpush.bf16.msra.mxu0 %v790
        %911 = vmatpush.bf16.msra.mxu0 %v782
        %912 = vmatpush.bf16.msra.mxu0 %v774
        %913 = vmatpush.bf16.msra.mxu0 %v766
        %914 = vmatpush.bf16.msra.mxu0 %v758
        %915 = vmatpush.bf16.msra.mxu0 %v750
        %916 = vmatpush.bf16.msra.mxu0 %v742
        %917 = vmatmul.bf16.gmra.mxu0 %v464
        %v918 = vpop.f32.mrf.mxu0
        %v919 = vadd.f32 %v534, %v918
        %v920 = vpop.f32.mrf.mxu0
        %v921 = vadd.f32 %v534, %v920
        %922 = vdwg.mxu0
        %923 = vmatpush.bf16.msra.mxu0 %v799
        %924 = vmatpush.bf16.msra.mxu0 %v791
        %925 = vmatpush.bf16.msra.mxu0 %v783
        %926 = vmatpush.bf16.msra.mxu0 %v775
        %927 = vmatpush.bf16.msra.mxu0 %v767
        %928 = vmatpush.bf16.msra.mxu0 %v759
        %929 = vmatpush.bf16.msra.mxu0 %v751
        %930 = vmatpush.bf16.msra.mxu0 %v743
        %931 = vmatmul.bf16.gmra.mxu0 %v464
        %v932 = vpop.f32.mrf.mxu0
        %v933 = vadd.f32 %v535, %v932
        %v934 = vpop.f32.mrf.mxu0
        %v935 = vadd.f32 %v535, %v934
        %936 = vdwg.mxu0
        %937 = vmatpush.bf16.msra.mxu0 %v800
        %938 = vmatpush.bf16.msra.mxu0 %v792
        %939 = vmatpush.bf16.msra.mxu0 %v784
        %940 = vmatpush.bf16.msra.mxu0 %v776
        %941 = vmatpush.bf16.msra.mxu0 %v768
        %942 = vmatpush.bf16.msra.mxu0 %v760
        %943 = vmatpush.bf16.msra.mxu0 %v752
        %944 = vmatpush.bf16.msra.mxu0 %v744
        %945 = vmatmul.bf16.gmra.mxu0 %v464
        %v946 = vpop.f32.mrf.mxu0
        %v947 = vadd.f32 %v536, %v946
        %v948 = vpop.f32.mrf.mxu0
        %v949 = vadd.f32 %v536, %v948
        %950 = vdwg.mxu0
        %951 = vmatpush.bf16.msra.mxu0 %v801
        %952 = vmatpush.bf16.msra.mxu0 %v793
        %953 = vmatpush.bf16.msra.mxu0 %v785
        %954 = vmatpush.bf16.msra.mxu0 %v777
        %955 = vmatpush.bf16.msra.mxu0 %v769
        %956 = vmatpush.bf16.msra.mxu0 %v761
        %957 = vmatpush.bf16.msra.mxu0 %v753
        %958 = vmatpush.bf16.msra.mxu0 %v745
        %959 = vmatmul.bf16.gmra.mxu0 %v464
        %v960 = vpop.f32.mrf.mxu0
        %v961 = vadd.f32 %v537, %v960
        %v962 = vpop.f32.mrf.mxu0
        %v963 = vadd.f32 %v537, %v962
        %964 = vdwg.mxu0
        %965 = vmatpush.bf16.msra.mxu0 %v802
        %966 = vmatpush.bf16.msra.mxu0 %v794
        %967 = vmatpush.bf16.msra.mxu0 %v786
        %968 = vmatpush.bf16.msra.mxu0 %v778
        %969 = vmatpush.bf16.msra.mxu0 %v770
        %970 = vmatpush.bf16.msra.mxu0 %v762
        %971 = vmatpush.bf16.msra.mxu0 %v754
        %972 = vmatpush.bf16.msra.mxu0 %v746
        %973 = vmatmul.bf16.gmra.mxu0 %v464
        %v974 = vpop.f32.mrf.mxu0
        %v975 = vadd.f32 %v538, %v974
        %v976 = vpop.f32.mrf.mxu0
        %v977 = vadd.f32 %v538, %v976
        %978 = vdwg.mxu0
        %v979 = vmax.f32 %v877, 0.0
        %v980 = vmax.f32 %v891, 0.0
        %v981 = vmax.f32 %v905, 0.0
        %v982 = vmax.f32 %v919, 0.0
        %v983 = vmax.f32 %v933, 0.0
        %v984 = vmax.f32 %v947, 0.0
        %v985 = vmax.f32 %v961, 0.0
        %v986 = vmax.f32 %v975, 0.0
        %v987 = vmax.f32 %v879, 0.0
        %v988 = vmax.f32 %v893, 0.0
        %v989 = vmax.f32 %v907, 0.0
        %v990 = vmax.f32 %v921, 0.0
        %v991 = vmax.f32 %v935, 0.0
        %v992 = vmax.f32 %v949, 0.0
        %v993 = vmax.f32 %v963, 0.0
        %v994 = vmax.f32 %v977, 0.0
        %v995 = vld [vmem:[#allocation2] sm:$0xff]
        %v996 = vmax.f32 %v979, %v987
        %v997 = vrot.slane %v996, 4
        %v998 = vmax.f32 %v996, %v997
        %v999 = vrot.slane %v998, 2
        %v1000 = vmax.f32 %v998, %v999
        %v1001 = vrot.slane %v1000, 1
        %v1002 = vmax.f32 %v1000, %v1001
        %v1003 = vmax.f32 %v980, %v988
        %v1004 = vrot.slane %v1003, 4
        %v1005 = vmax.f32 %v1003, %v1004
        %v1006 = vrot.slane %v1005, 2
        %v1007 = vmax.f32 %v1005, %v1006
        %v1008 = vrot.slane %v1007, 1
        %v1009 = vmax.f32 %v1007, %v1008
        %v1010 = vmax.f32 %v981, %v989
        %v1011 = vrot.slane %v1010, 4
        %v1012 = vmax.f32 %v1010, %v1011
        %v1013 = vrot.slane %v1012, 2
        %v1014 = vmax.f32 %v1012, %v1013
        %v1015 = vrot.slane %v1014, 1
        %v1016 = vmax.f32 %v1014, %v1015
        %v1017 = vmax.f32 %v982, %v990
        %v1018 = vrot.slane %v1017, 4
        %v1019 = vmax.f32 %v1017, %v1018
        %v1020 = vrot.slane %v1019, 2
        %v1021 = vmax.f32 %v1019, %v1020
        %v1022 = vrot.slane %v1021, 1
        %v1023 = vmax.f32 %v1021, %v1022
        %v1024 = vmax.f32 %v983, %v991
        %v1025 = vrot.slane %v1024, 4
        %v1026 = vmax.f32 %v1024, %v1025
        %v1027 = vrot.slane %v1026, 2
        %v1028 = vmax.f32 %v1026, %v1027
        %v1029 = vrot.slane %v1028, 1
        %v1030 = vmax.f32 %v1028, %v1029
        %v1031 = vmax.f32 %v984, %v992
        %v1032 = vrot.slane %v1031, 4
        %v1033 = vmax.f32 %v1031, %v1032
        %v1034 = vrot.slane %v1033, 2
        %v1035 = vmax.f32 %v1033, %v1034
        %v1036 = vrot.slane %v1035, 1
        %v1037 = vmax.f32 %v1035, %v1036
        %v1038 = vmax.f32 %v985, %v993
        %v1039 = vrot.slane %v1038, 4
        %v1040 = vmax.f32 %v1038, %v1039
        %v1041 = vrot.slane %v1040, 2
        %v1042 = vmax.f32 %v1040, %v1041
        %v1043 = vrot.slane %v1042, 1
        %v1044 = vmax.f32 %v1042, %v1043
        %v1045 = vmax.f32 %v986, %v994
        %v1046 = vrot.slane %v1045, 4
        %v1047 = vmax.f32 %v1045, %v1046
        %v1048 = vrot.slane %v1047, 2
        %v1049 = vmax.f32 %v1047, %v1048
        %v1050 = vrot.slane %v1049, 1
        %v1051 = vmax.f32 %v1049, %v1050
        %v1060 = vrot.slane %v1009, 7
        %v1061 = vrot.slane %v1016, 6
        %v1062 = vrot.slane %v1023, 5
        %v1063 = vrot.slane %v1030, 4
        %v1064 = vrot.slane %v1037, 3
        %v1065 = vrot.slane %v1044, 2
        %v1066 = vrot.slane %v1051, 1
        %vm1067 = vcmask 1040384
        %v1068 = vsel %vm1067, %v1002, %v1060
        %vm1069 = vcmask 1042434
        %v1070 = vsel %vm1069, %v1061, %v1062
        %vm1071 = vcmask 1041408
        %v1072 = vsel %vm1071, %v1068, %v1070
        %vm1073 = vcmask 1044484
        %v1074 = vsel %vm1073, %v1063, %v1064
        %vm1075 = vcmask 1046534
        %v1076 = vsel %vm1075, %v1065, %v1066
        %vm1077 = vcmask 1045508
        %v1078 = vsel %vm1077, %v1074, %v1076
        %vm1079 = vcmask 1043456
        %v1080 = vsel %vm1079, %v1072, %v1078
        %v1082 = vmax.f32 %v995, %v1080
        %1083 = vst [vmem:[#allocation2] sm:$0xff] %v1082
        // Predicated region
        $region65: #{tpu_custom_call.1} parent=47 // pred_check
          %p1084 = pneg %p352
        $region66: #{tpu_custom_call.1} parent=47 // pred_check_branch
          %1086 = sbr.rel (%p1084) target = $region68
        $region67: #{tpu_custom_call.1} parent=47 // pred_region
          %v1087 = vld [vmem:[#allocation2] sm:$0xff]
          %1088 = vst [vmem:[%s340] sm:$0xff] %v1087
        $region68: #{tpu_custom_call.1} parent=47 // pred_fallthru
          _
        %s1089 = sand.u32 %s197, 1
        %s1090 = scalar_lea.sflag [#allocation5], %s1089
        %s1091 = sand.u32 %s197, 1
        %s1092 = smul.addr %s1091, 8
        %s1093 = scalar_lea.vmem [#allocation9], %s1092
        // Predicated region
        $region69: #{tpu_custom_call.1} parent=47 // pred_check
          %p1094 = pneg %p207
        $region70: #{tpu_custom_call.1} parent=47 // pred_check_branch
          %1096 = sbr.rel (%p1094) target = $region72
        $region71: #{tpu_custom_call.1} parent=47 // pred_region
          %1098 = vsyncadd %s1090, 0
          %s1099 = smul.addr %s27, 8
          %s1100 = scalar_lea.hbm %s7, %s1099
          %s1102 = sshll.u32 %s1093, 4
          %s1103 = int_to_ptr.vmem [resolvable:$true] %s1102
          %s1104 = sshll.u32 %s1100, 4
          %s1105 = int_to_ptr.hbm [resolvable:$true] %s1104
          %1107 = dma.vmem_to_hbm [thread:$0]  %s1103, 128, %s1105, %s1090
        $region72: #{tpu_custom_call.1} parent=47 // pred_fallthru
          _
      $region48: #{tpu_custom_call.1} parent=5 // pred_fallthru
        _
      %p1108 = scmp.le.s32.totalorder 2, %s18
      // Predicated region
      $region73: #{tpu_custom_call.1} parent=5 // pred_check
        %p1109 = pneg %p1108
      $region74: #{tpu_custom_call.1} parent=5 // pred_check_branch
        %1111 = sbr.rel (%p1109) target = $region76
      $region75: #{tpu_custom_call.1} parent=5 // pred_region
        %s1112 = ssub.s32 %s18, 2
        // Predicated region
        $region77: #{tpu_custom_call.1} parent=75 // pred_check
          %p1113 = pneg %p213
        $region78: #{tpu_custom_call.1} parent=75 // pred_check_branch
          %1115 = sbr.rel (%p1113) target = $region80
        $region79: #{tpu_custom_call.1} parent=75 // pred_region
          %s1116 = sand.u32 %s198, 1
          %s1117 = scalar_lea.sflag [#allocation5], %s1116
          %s1118 = sand.u32 %s198, 1
          %s1119 = smul.addr %s1118, 8
          %s1120 = scalar_lea.vmem [#allocation9], %s1119
          %1122 = dma.done %s1117, 128
        $region80: #{tpu_custom_call.1} parent=75 // pred_fallthru
          _
      $region76: #{tpu_custom_call.1} parent=5 // pred_fallthru
        _
    $region6: #{tpu_custom_call.1} parent=1 // loop_footer
      %s22 = sadd.s32 1, %s18
    $region7: #{tpu_custom_call.1} parent=1 // loop_footer_branch
      %17 = sbr.rel target = $region3
    $region8: #{tpu_custom_call.1} parent=1 // loop_exit
      _
    %1123 = vsyncpa [#allocation4], 1
    %s1124 = scalar_lea.sflag [#allocation4], 1
    %1125 = vsyncpa %s1124, 1
    %1126 = vsyncpa [#allocation7], 1
    %1127 = vsyncpa [#allocation5], 1
    %s1128 = scalar_lea.sflag [#allocation5], 1
    %1129 = vsyncpa %s1128, 1

</llo_original>
